<compile_context>
chip_gen: v7x
topology: tpu7x:2x2x1
jax: 0.10.0
libtpu: 0.0.40
codegen_flags: <defaults>
</compile_context>

<pallas_src>
import jax
import jax.numpy as jnp
from jax.experimental import pallas as pl
from jax.experimental.pallas import tpu as pltpu


def _reghead_kernel(x_ref, mask_ref, w_att_ref, b_att_ref,
                    w_reg_ref, b_reg_ref, out_ref):
    # Per grid step: a block of BB batch elements.
    x = x_ref[...]                        # (BB, S, D)
    mask = mask_ref[...]                  # (BB, S)
    b_att = b_att_ref[0]                  # scalar attention bias from SMEM

    # Attention logits, lane-oriented: (BB, S) with S on the lane axis.
    # (VPU multiply + XLU lane reduce over D; layout-natural for the softmax.)
    att = jnp.sum(x * w_att_ref[...], axis=-1) + b_att          # (BB, S)
    # Exactly mirror the PyTorch expression (tiny additive mask term).
    att = att + (1.0 - mask) * 1e-9

    # Softmax along the last (lane) axis.
    att = att - jnp.max(att, axis=-1, keepdims=True)
    e = jnp.exp(att)
    inv = pl.reciprocal(jnp.sum(e, axis=-1, keepdims=True))     # EUP; exact f32
    p = e * inv                                                  # (BB, S)

    # Attention-weighted pooling on the MXU: per batch (1, S) @ (S, D).
    pooled = jnp.einsum("bqs,bsd->bqd", p[:, None, :], x,
                        preferred_element_type=jnp.float32)[:, 0, :]   # (BB, D)

    # Regression projection on the MXU: (BB, D) @ (D, Cp) + (1, Cp), lane-dense.
    out = jnp.dot(pooled, w_reg_ref[...], preferred_element_type=jnp.float32)
    out_ref[...] = (out + b_reg_ref[...]).astype(out_ref.dtype)


def _pick_block_b(batch, seq, hidden, target_bytes=8 << 20, min_steps=4):
    """Largest batch block whose x tile is ~target_bytes (f32), while
      * keeping >= min_steps grid steps when the batch can be split into
        sublane-legal multiples of 8 (pipeline overlap + v7x megacore), and
      * keeping the batch block equal to the full batch or a multiple of 8
        that divides it (so (BB, S)/(BB, Cp) blocks satisfy the (8,128) rule).
    ~8 MiB tiles double-buffered stay well inside the raised VMEM limit."""
    per_row = seq * hidden * 4
    bb = max(1, target_bytes // per_row)
    if batch >= 8 * min_steps:
        bb = min(bb, batch // min_steps)
    elif batch >= 16:
        bb = min(bb, batch // 2)
    if bb >= batch:
        return batch
    bb = max(8, (bb // 8) * 8)
    while bb > 8 and batch % bb != 0:
        bb -= 8
    if batch % bb != 0:
        return batch            # fallback: single block; always correct
    return bb


def regression_head(x, mask, w_att, b_att, w_reg, b_reg, *, block_b=None):
    """x: (B, S, D) f32, mask: (B, S) f32 -> (B, C) f32."""
    B, S, D = x.shape
    C = w_reg.shape[1]
    CP = max(128, ((C + 127) // 128) * 128)            # lane-dense output width

    mask2 = mask.astype(x.dtype)                       # (B, S)
    w_att3 = w_att.reshape(1, 1, D).astype(x.dtype)    # broadcast over (BB, S)
    b_att1 = b_att.reshape(1).astype(jnp.float32)      # SMEM scalar
    # Zero-pad the regression projection to a lane-dense width; sliced after.
    w_regp = jnp.pad(w_reg.astype(x.dtype), ((0, 0), (0, CP - C)))
    b_regp = jnp.pad(b_reg.reshape(1, C).astype(x.dtype), ((0, 0), (0, CP - C)))

    BB = block_b if block_b is not None else _pick_block_b(B, S, D)
    grid = (B // BB,)

    # x double-buffer + one full-tile temp + headroom; capped at 48 MiB so it
    # is legal on v7x (64 MiB/TC) while lifting the v5e/v6e scoped defaults.
    x_tile_bytes = BB * S * D * 4
    vmem_limit = int(min(max(3 * x_tile_bytes + (4 << 20), 32 << 20), 48 << 20))

    cost = pl.CostEstimate(
        flops=2 * B * S * D          # attention logits
              + 2 * B * S * D        # pooling matmul
              + 2 * B * D * CP       # regression matmul
              + 6 * B * S,           # softmax elementwise
        transcendentals=B * S + B,
        bytes_accessed=4 * (B * S * D + B * S + D + D * CP + CP + B * CP),
    )

    out = pl.pallas_call(
        _reghead_kernel,
        out_shape=jax.ShapeDtypeStruct((B, CP), x.dtype),
        grid=grid,
        in_specs=[
            pl.BlockSpec((BB, S, D), lambda b: (b, 0, 0)),        # x block
            pl.BlockSpec((BB, S), lambda b: (b, 0)),              # mask block
            pl.BlockSpec((1, 1, D), lambda b: (0, 0, 0)),         # w_att
            pl.BlockSpec(memory_space=pltpu.MemorySpace.SMEM),    # b_att scalar
            pl.BlockSpec((D, CP), lambda b: (0, 0)),              # w_reg (padded)
            pl.BlockSpec((1, CP), lambda b: (0, 0)),              # b_reg (padded)
        ],
        out_specs=pl.BlockSpec((BB, CP), lambda b: (b, 0)),
        compiler_params=pltpu.CompilerParams(
            dimension_semantics=("parallel",),    # batch blocks independent
            vmem_limit_bytes=vmem_limit,
        ),
        cost_estimate=cost,
    )(x, mask2, w_att3, b_att1, w_regp, b_regp)

    return out[:, :C]


def regression_head_ref(x, mask, w_att, b_att, w_reg, b_reg):
    att = jnp.einsum("bsd,dk->bsk", x, w_att) + b_att            # (B, S, 1)
    att = att + (1.0 - mask[..., None]) * 1e-9
    p = jax.nn.softmax(att, axis=1)
    pooled = jnp.sum(x * p, axis=1)                              # (B, D)
    return pooled @ w_reg + b_reg


if __name__ == "__main__":
    B, S, D, C = 2, 8, 32, 4   # batch, seq, hidden, n_classes

    key = jax.random.PRNGKey(0)
    kx, km, k1, k2, k3, k4 = jax.random.split(key, 6)

    x = jax.random.normal(kx, (B, S, D), dtype=jnp.float32)
    mask = (jax.random.uniform(km, (B, S)) > 0.3).astype(jnp.float32)

    # Deterministic synthetic parameters (shapes per LazyLinear(1) / LazyLinear(C)).
    w_att = jax.random.normal(k1, (D, 1), dtype=jnp.float32) * 0.1
    b_att = jax.random.normal(k2, (1,), dtype=jnp.float32) * 0.1
    w_reg = jax.random.normal(k3, (D, C), dtype=jnp.float32) * 0.1
    b_reg = jax.random.normal(k4, (C,), dtype=jnp.float32) * 0.1

    out = regression_head(x, mask, w_att, b_att, w_reg, b_reg)
    out = jax.block_until_ready(out)

    ref = regression_head_ref(x, mask, w_att, b_att, w_reg, b_reg)
    assert out.shape == (B, C)
    assert jnp.allclose(out, ref, atol=1e-5, rtol=1e-5), (out, ref)

    print("KERNEL_OK")
</pallas_src>

<mosaic_0001>
module attributes {stable_mosaic.version = 11 : i64} {
  func.func @_reghead_kernel(%arg0: i32, %arg1: memref<2x8x32xf32, #tpu.memory_space<vmem>>, %arg2: memref<2x8xf32, #tpu.memory_space<vmem>>, %arg3: memref<1x1x32xf32, #tpu.memory_space<vmem>>, %arg4: memref<1xf32, #tpu.memory_space<smem>>, %arg5: memref<32x128xf32, #tpu.memory_space<vmem>>, %arg6: memref<1x128xf32, #tpu.memory_space<vmem>>, %arg7: memref<2x128xf32, #tpu.memory_space<vmem>>) attributes {dimension_semantics = [#tpu.dimension_semantics<parallel>], iteration_bounds = array<i64: 1>, scalar_prefetch = 0 : i64, scratch_operands = 0 : i64, tpu.core_type = #tpu.core_type<tc>, window_params = [{transform_indices = @transform_0, window_bounds = array<i64: 2, 8, 32>}, {transform_indices = @transform_1, window_bounds = array<i64: 2, 8>}, {pipeline_mode = #tpu.pipeline_mode<synchronous>, transform_indices = @transform_2, window_bounds = array<i64: 1, 1, 32>}, {transform_indices = @transform_3, window_bounds = array<i64: 1>}, {pipeline_mode = #tpu.pipeline_mode<synchronous>, transform_indices = @transform_4, window_bounds = array<i64: 32, 128>}, {pipeline_mode = #tpu.pipeline_mode<synchronous>, transform_indices = @transform_5, window_bounds = array<i64: 1, 128>}, {transform_indices = @transform_6, window_bounds = array<i64: 2, 128>}]} {
    %c0 = arith.constant 0 : index
    %c0_0 = arith.constant 0 : index
    %c0_1 = arith.constant 0 : index
    %0 = vector.load %arg1[%c0, %c0_0, %c0_1] : memref<2x8x32xf32, #tpu.memory_space<vmem>>, vector<2x8x32xf32>
    %c0_2 = arith.constant 0 : index
    %c0_3 = arith.constant 0 : index
    %1 = vector.load %arg2[%c0_2, %c0_3] : memref<2x8xf32, #tpu.memory_space<vmem>>, vector<2x8xf32>
    %c0_4 = arith.constant 0 : index
    %2 = memref.load %arg4[%c0_4] : memref<1xf32, #tpu.memory_space<smem>>
    %c0_5 = arith.constant 0 : index
    %c0_6 = arith.constant 0 : index
    %c0_7 = arith.constant 0 : index
    %3 = vector.load %arg3[%c0_5, %c0_6, %c0_7] : memref<1x1x32xf32, #tpu.memory_space<vmem>>, vector<1x1x32xf32>
    %4 = vector.broadcast %3 : vector<1x1x32xf32> to vector<2x8x32xf32>
    %5 = arith.mulf %0, %4 : vector<2x8x32xf32>
    %cst = arith.constant dense<0.000000e+00> : vector<2x8xf32>
    %6 = vector.multi_reduction <add>, %5, %cst [2] : vector<2x8x32xf32> to vector<2x8xf32>
    %7 = vector.broadcast %2 : f32 to vector<2x8xf32>
    %8 = arith.addf %6, %7 : vector<2x8xf32>
    %cst_8 = arith.constant 1.000000e+00 : f32
    %9 = vector.broadcast %cst_8 : f32 to vector<2x8xf32>
    %10 = arith.subf %9, %1 : vector<2x8xf32>
    %cst_9 = arith.constant 9.99999971E-10 : f32
    %11 = vector.broadcast %cst_9 : f32 to vector<2x8xf32>
    %12 = arith.mulf %10, %11 : vector<2x8xf32>
    %13 = arith.addf %8, %12 : vector<2x8xf32>
    %cst_10 = arith.constant dense<0xFF800000> : vector<2xf32>
    %14 = vector.multi_reduction <maximumf>, %13, %cst_10 [1] : vector<2x8xf32> to vector<2xf32>
    %15 = vector.shape_cast %14 : vector<2xf32> to vector<2x1xf32>
    %16 = vector.broadcast %15 : vector<2x1xf32> to vector<2x8xf32>
    %17 = arith.subf %13, %16 : vector<2x8xf32>
    %18 = math.exp %17 : vector<2x8xf32>
    %cst_11 = arith.constant dense<0.000000e+00> : vector<2xf32>
    %19 = vector.multi_reduction <add>, %18, %cst_11 [1] : vector<2x8xf32> to vector<2xf32>
    %20 = vector.shape_cast %19 : vector<2xf32> to vector<2x1xf32>
    %21 = tpu.reciprocal %20 : vector<2x1xf32> -> vector<2x1xf32>
    %22 = vector.broadcast %21 : vector<2x1xf32> to vector<2x8xf32>
    %23 = arith.mulf %18, %22 : vector<2x8xf32>
    %24 = vector.shape_cast %23 : vector<2x8xf32> to vector<2x1x8xf32>
    "tpu.trace_start"() <{level = 10 : i32, message = "bqs,bsd->bqd"}> : () -> ()
    %cst_12 = arith.constant dense<0.000000e+00> : vector<2x1x32xf32>
    %25 = tpu.matmul %24, %0, %cst_12 {dimension_numbers = #tpu.dot_dimension_numbers<[2], [1], [1], [2], [0, 0, 0, 1, 1, 2], [0], [0]>} : vector<2x1x8xf32>, vector<2x8x32xf32>, vector<2x1x32xf32> -> vector<2x1x32xf32>
    "tpu.trace_stop"() : () -> ()
    %26 = vector.shape_cast %25 : vector<2x1x32xf32> to vector<2x32xf32>
    %c0_13 = arith.constant 0 : index
    %c0_14 = arith.constant 0 : index
    %27 = vector.load %arg5[%c0_13, %c0_14] : memref<32x128xf32, #tpu.memory_space<vmem>>, vector<32x128xf32>
    %cst_15 = arith.constant dense<0.000000e+00> : vector<2x128xf32>
    %28 = tpu.matmul %26, %27, %cst_15 {dimension_numbers = #tpu.dot_dimension_numbers<[1], [0], [0], [1], [0, 0, 1, 1], [], []>} : vector<2x32xf32>, vector<32x128xf32>, vector<2x128xf32> -> vector<2x128xf32>
    %c0_16 = arith.constant 0 : index
    %c0_17 = arith.constant 0 : index
    %29 = vector.load %arg6[%c0_16, %c0_17] : memref<1x128xf32, #tpu.memory_space<vmem>>, vector<1x128xf32>
    %30 = vector.broadcast %29 : vector<1x128xf32> to vector<2x128xf32>
    %31 = arith.addf %28, %30 : vector<2x128xf32>
    %c0_18 = arith.constant 0 : index
    %c0_19 = arith.constant 0 : index
    %32 = vector.load %arg7[%c0_18, %c0_19] : memref<2x128xf32, #tpu.memory_space<vmem>>, vector<2x128xf32>
    tpu.vector_store %arg7[%c0_18, %c0_19], %31 {strides = array<i32>} : memref<2x128xf32, #tpu.memory_space<vmem>>, vector<2x128xf32>,
    return
  }
  func.func @transform_0(%arg0: i32) -> (i32, i32, i32) {
    %c0_i32 = arith.constant 0 : i32
    %c0_i32_0 = arith.constant 0 : i32
    %c0_i32_1 = arith.constant 0 : i32
    return %arg0, %c0_i32, %c0_i32_0 : i32, i32, i32
  }
  func.func @transform_1(%arg0: i32) -> (i32, i32) {
    %c0_i32 = arith.constant 0 : i32
    %c0_i32_0 = arith.constant 0 : i32
    return %arg0, %c0_i32 : i32, i32
  }
  func.func @transform_2(%arg0: i32) -> (i32, i32, i32) {
    %c0_i32 = arith.constant 0 : i32
    %c0_i32_0 = arith.constant 0 : i32
    %c0_i32_1 = arith.constant 0 : i32
    %c0_i32_2 = arith.constant 0 : i32
    return %c0_i32, %c0_i32_0, %c0_i32_1 : i32, i32, i32
  }
  func.func @transform_3(%arg0: i32) -> i32 {
    %c0_i32 = arith.constant 0 : i32
    %c0_i32_0 = arith.constant 0 : i32
    return %c0_i32 : i32
  }
  func.func @transform_4(%arg0: i32) -> (i32, i32) {
    %c0_i32 = arith.constant 0 : i32
    %c0_i32_0 = arith.constant 0 : i32
    %c0_i32_1 = arith.constant 0 : i32
    return %c0_i32, %c0_i32_0 : i32, i32
  }
  func.func @transform_5(%arg0: i32) -> (i32, i32) {
    %c0_i32 = arith.constant 0 : i32
    %c0_i32_0 = arith.constant 0 : i32
    %c0_i32_1 = arith.constant 0 : i32
    return %c0_i32, %c0_i32_0 : i32, i32
  }
  func.func @transform_6(%arg0: i32) -> (i32, i32) {
    %c0_i32 = arith.constant 0 : i32
    %c0_i32_0 = arith.constant 0 : i32
    return %arg0, %c0_i32 : i32, i32
  }
}

</mosaic_0001>

<llo_original>
// kernel: tpu_custom_call.1
$region0: #{tpu_custom_call.1}
  #allocation0 [shape = 'u32[]', space=smem, size = 0x4, offset = 0x4, fixed_abs, tag = 'smem constant byte address 0x4 - core index']
  #allocation1 [shape = 'u32[144,128]{1,0:T(1,128)}', space=vmem, size = 0x12000, scoped, tag = 'internal scratch']
  #allocation2 [shape = 'f32[1]{0:T(128)S(6)}', space=smem, size = 0x200, scoped, tag = 'scoped memory for tpu_custom_call.1']
  %s0 = inlined_call_operand.hbm [shape: f32[2,8,32], index: 0, kind: input, shape index: {}]
  %s1 = inlined_call_operand.vmem [shape: f32[2,8], index: 1, kind: input, shape index: {}]
  %s2 = inlined_call_operand.vmem [shape: f32[1,1,32], index: 2, kind: input, shape index: {}]
  %s3 = inlined_call_operand.<no memory space> [shape: f32[1], index: 3, kind: input, shape index: {}]
  %s4 = inlined_call_operand.hbm [shape: f32[32,128], index: 4, kind: input, shape index: {}]
  %s5 = inlined_call_operand.vmem [shape: f32[1,128], index: 5, kind: input, shape index: {}]
  %s6 = inlined_call_operand.hbm [shape: f32[2,128], index: 6, kind: output, shape index: {}]
  %s7 = sld [smem:[#allocation0]]
  $region42: #{tpu_custom_call.1} parent=0
    _
  %s9 = ssub.s32 1, %s7
  %s10 = scalar_select 0, %s9, %s7
  %11 = sst [smem:[#allocation2]] %s3
  $region1: #{tpu_custom_call.1} parent=0
    #allocation3 [shape = 'u8[8192]{0}', space=vmem, size = 0x2000, scoped, tag = 'input window, operand 0, single buffered']
    #allocation4 [shape = 's32[1]{0}', space=sflag, size = 0x4, scoped, tag = 'scoped memory for tpu_custom_call.1']
    #allocation5 [shape = 's32[1]{0}', space=sflag, size = 0x4, scoped, tag = 'scoped memory for tpu_custom_call.1']
    #allocation6 [shape = 'u8[16384]{0}', space=vmem, size = 0x4000, scoped, tag = 'input window, operand 4, single buffered']
    #allocation7 [shape = 's32[1]{0}', space=sflag, size = 0x4, scoped, tag = 'scoped memory for tpu_custom_call.1']
    #allocation8 [shape = 'u8[1024]{0}', space=vmem, size = 0x400, scoped, tag = 'output window, operand 0, single buffered']
    %12 = vsyncpa [#allocation4], 0
    %13 = vsyncpa [#allocation7], 0
    %14 = vsyncpa [#allocation5], 0
    // Predicated region
    $region2: #{tpu_custom_call.1} parent=1 // pred_check
      _
    $region3: #{tpu_custom_call.1} parent=1 // pred_check_branch
      %16 = sbr.rel (0) target = $region5
    $region4: #{tpu_custom_call.1} parent=1 // pred_region
      %s18 = ssub.s32 256, 256
      %19 = vsyncadd [#allocation4], %s18
      %s20 = sshll.u32 [#allocation3], 4
      %s21 = int_to_ptr.vmem [resolvable:$true] %s20
      %26 = dma.hbm_to_vmem [thread:$0]  %s0, 256, %s21, [#allocation4], 128, 128, 8
    $region5: #{tpu_custom_call.1} parent=1 // pred_fallthru
      _
    // Predicated region
    $region6: #{tpu_custom_call.1} parent=1 // pred_check
      _
    $region7: #{tpu_custom_call.1} parent=1 // pred_check_branch
      %28 = sbr.rel (0) target = $region9
    $region8: #{tpu_custom_call.1} parent=1 // pred_region
      _
    $region9: #{tpu_custom_call.1} parent=1 // pred_fallthru
      _
    // Predicated region
    $region10: #{tpu_custom_call.1} parent=1 // pred_check
      _
    $region11: #{tpu_custom_call.1} parent=1 // pred_check_branch
      %30 = sbr.rel (0) target = $region13
    $region12: #{tpu_custom_call.1} parent=1 // pred_region
      _
    $region13: #{tpu_custom_call.1} parent=1 // pred_fallthru
      _
    // Predicated region
    $region14: #{tpu_custom_call.1} parent=1 // pred_check
      _
    $region15: #{tpu_custom_call.1} parent=1 // pred_check_branch
      %32 = sbr.rel (0) target = $region17
    $region16: #{tpu_custom_call.1} parent=1 // pred_region
      _
    $region17: #{tpu_custom_call.1} parent=1 // pred_fallthru
      _
    // Predicated region
    $region18: #{tpu_custom_call.1} parent=1 // pred_check
      _
    $region19: #{tpu_custom_call.1} parent=1 // pred_check_branch
      %34 = sbr.rel (0) target = $region21
    $region20: #{tpu_custom_call.1} parent=1 // pred_region
      %s36 = ssub.s32 512, 512
      %37 = vsyncadd [#allocation7], %s36
      %s38 = sshll.u32 [#allocation6], 4
      %s39 = int_to_ptr.vmem [resolvable:$true] %s38
      %44 = dma.hbm_to_vmem [thread:$0]  %s4, 512, %s39, [#allocation7], 128, 128, 8
    $region21: #{tpu_custom_call.1} parent=1 // pred_fallthru
      _
    // Predicated region
    $region22: #{tpu_custom_call.1} parent=1 // pred_check
      _
    $region23: #{tpu_custom_call.1} parent=1 // pred_check_branch
      %46 = sbr.rel (0) target = $region25
    $region24: #{tpu_custom_call.1} parent=1 // pred_region
      _
    $region25: #{tpu_custom_call.1} parent=1 // pred_fallthru
      _
    // Predicated region
    $region26: #{tpu_custom_call.1} parent=1 // pred_check
      _
    $region27: #{tpu_custom_call.1} parent=1 // pred_check_branch
      %48 = sbr.rel (0) target = $region29
    $region28: #{tpu_custom_call.1} parent=1 // pred_region
      %49 = dma.done [#allocation4], 256
    $region29: #{tpu_custom_call.1} parent=1 // pred_fallthru
      _
    // Predicated region
    $region30: #{tpu_custom_call.1} parent=1 // pred_check
      _
    $region31: #{tpu_custom_call.1} parent=1 // pred_check_branch
      %51 = sbr.rel (0) target = $region33
    $region32: #{tpu_custom_call.1} parent=1 // pred_region
      %52 = dma.done [#allocation7], 512
    $region33: #{tpu_custom_call.1} parent=1 // pred_fallthru
      _
    %v53 = vld [vmem:[#allocation3] sm:$0xff]
    %v54 = vld [vmem:[#allocation3 + $0x8] sm:$0xff]
    %v55 = vld [vmem:[%s1] sm:$0x3]
    %s56 = sld [smem:[#allocation2]]
    %v57 = vld [vmem:[%s2] sm:$0x1]
    %v59 = vlaneseq
    %v60 = vshrl.u32 %v59, 7
    %v61 = vsub.s32 0, %v60
    %v62 = vrot.slane %v57, %v61
    %v64 = vmul.f32 %v53, %v62
    %v65 = vmul.f32 %v54, %v62
    %vm66 = vcmask 261120
    %v67 = vsel %vm66, %v64, 0.0
    %68 = vadd.xlane.f32.xlu0 %v67
    %v69 = vpop.xlane.xlu0 %68
    %v70 = vsel %vm66, %v65, 0.0
    %71 = vadd.xlane.f32.xlu0 %v70
    %v72 = vpop.xlane.xlu0 %71
    %v73 = vstv %s56
    %v74 = vadd.f32 %v69, %v73
    %v75 = vadd.f32 %v72, %v73
    %v76 = vsub.f32 1.0, %v55
    %v77 = vmul.f32 %v76, 1e-09
    %v79 = vlaneseq
    %v80 = vshrl.u32 %v79, 7
    %v81 = vsub.s32 0, %v80
    %v82 = vrot.slane %v77, %v81
    %84 = vbcast.lane.b32.xlu0 %v82, 256
    %v85 = vpop.permute.xlu0 %84
    %v86 = vlaneseq
    %v87 = vshrl.u32 %v86, 7
    %v88 = vsub.s32 1, %v87
    %v89 = vrot.slane %v77, %v88
    %91 = vbcast.lane.b32.xlu0 %v89, 256
    %v92 = vpop.permute.xlu0 %91
    %v95 = vadd.f32 %v74, %v85
    %v96 = vadd.f32 %v75, %v92
    %99 = vset.pattern.permute.xlu0 0
    %100 = vperm.xlu0 %99, %v95
    %v101 = vpop.permute.xlu0 %100
    %102 = vset.pattern.permute.xlu0 0
    %103 = vperm.xlu0 %102, %v96
    %v104 = vpop.permute.xlu0 %103
    %v105 = vlaneseq
    %v106 = vand.u32 %v105, 127
    %v107 = vlaneseq
    %v108 = vshrl.u32 %v107, 7
    %v109 = vsub.s32 %v106, %v108
    %v110 = vrot.slane %v101, %v109
    %v111 = vlaneseq
    %v112 = vshrl.u32 %v111, 7
    %v113 = vsub.s32 %v106, %v112
    %v114 = vrot.slane %v104, %v113
    %vm115 = vcmask 1041409
    %v116 = vsel %vm115, %v114, %v110
    %vm118 = vcmask 58368
    %v119 = vsel %vm118, %v116, -inf
    %120 = vmax.xlane.f32.xlu0 %v119
    %v121 = vpop.xlane.xlu0 %120
    %v123 = vlaneseq
    %v124 = vshrl.u32 %v123, 7
    %v125 = vsub.s32 0, %v124
    %v126 = vrot.slane %v121, %v125
    %v127 = vlaneseq
    %v128 = vshrl.u32 %v127, 7
    %v129 = vsub.s32 1, %v128
    %v130 = vrot.slane %v121, %v129
    %v133 = vsub.f32 %v95, %v126
    %v134 = vsub.f32 %v96, %v130
    %v135 = vmul.f32 %v133, 1.442695
    %v136 = vpow.pop %v135
    %v137 = vmul.f32 %v134, 1.442695
    %v138 = vpow.pop %v137
    %141 = vset.pattern.permute.xlu0 0
    %142 = vperm.xlu0 %141, %v136
    %v143 = vpop.permute.xlu0 %142
    %144 = vset.pattern.permute.xlu0 0
    %145 = vperm.xlu0 %144, %v138
    %v146 = vpop.permute.xlu0 %145
    %v147 = vlaneseq
    %v148 = vshrl.u32 %v147, 7
    %v149 = vsub.s32 %v106, %v148
    %v150 = vrot.slane %v143, %v149
    %v151 = vlaneseq
    %v152 = vshrl.u32 %v151, 7
    %v153 = vsub.s32 %v106, %v152
    %v154 = vrot.slane %v146, %v153
    %v155 = vsel %vm115, %v154, %v150
    %v157 = vsel %vm118, %v155, 0.0
    %158 = vadd.xlane.f32.xlu0 %v157
    %v159 = vpop.xlane.xlu0 %158
    %v160 = vrcp.pop %v159
    %v162 = vlaneseq
    %v163 = vshrl.u32 %v162, 7
    %v164 = vsub.s32 0, %v163
    %v165 = vrot.slane %v160, %v164
    %v166 = vlaneseq
    %v167 = vshrl.u32 %v166, 7
    %v168 = vsub.s32 1, %v167
    %v169 = vrot.slane %v160, %v168
    %v172 = vmul.f32 %v136, %v165
    %v173 = vmul.f32 %v138, %v169
    %175 = vset.pattern.permute.xlu0 0
    %176 = vperm.xlu0 %175, %v172
    %v177 = vpop.permute.xlu0 %176
    %v178 = vlaneseq
    %v179 = vshrl.u32 %v178, 7
    %v180 = vsub.s32 %v106, %v179
    %v181 = vrot.slane %v177, %v180
    %vm182 = vcmask 64512
    %v183 = vsel %vm182, %v181, 0
    %185 = vmatprep.subr.mxu0 0.0
    %186 = vmatpush1.msra.mxu0 %v53
    %187 = vmatprep.subr.mxu0 0.0
    %188 = vmatpush1.msra.mxu0 0.0
    %189 = vmatprep.subr.mxu0 0.0
    %190 = vmatpush1.msra.mxu0 0.0
    %191 = vmatprep.subr.mxu0 0.0
    %192 = vmatpush1.msra.mxu0 0.0
    %193 = vmatprep.subr.mxu0 0.0
    %194 = vmatpush1.msra.mxu0 0.0
    %195 = vmatprep.subr.mxu0 0.0
    %196 = vmatpush1.msra.mxu0 0.0
    %197 = vmatprep.subr.mxu0 0.0
    %198 = vmatpush1.msra.mxu0 0.0
    %199 = vmatprep.subr.mxu0 0.0
    %200 = vmatpush1.msra.mxu0 0.0
    %201 = vmatprep.subr.mxu0 0.0
    %202 = vmatpush1.msra.mxu0 0.0
    %203 = vmatprep.subr.mxu0 0.0
    %204 = vmatpush1.msra.mxu0 0.0
    %205 = vmatprep.subr.mxu0 0.0
    %206 = vmatpush1.msra.mxu0 0.0
    %207 = vmatprep.subr.mxu0 0.0
    %208 = vmatpush1.msra.mxu0 0.0
    %209 = vmatprep.subr.mxu0 0.0
    %210 = vmatpush1.msra.mxu0 0.0
    %211 = vmatprep.subr.mxu0 0.0
    %212 = vmatpush1.msra.mxu0 0.0
    %213 = vmatprep.subr.mxu0 0.0
    %214 = vmatpush1.msra.mxu0 0.0
    %215 = vmatprep.subr.mxu0 0.0
    %216 = vmatpush1.msra.mxu0 0.0
    %217 = vmatprep.subr.mxu0 0.0
    %218 = vmatpush1.msra.mxu0 0.0
    %219 = vmatprep.subr.mxu0 0.0
    %220 = vmatpush1.msra.mxu0 0.0
    %221 = vmatprep.subr.mxu0 0.0
    %222 = vmatpush1.msra.mxu0 0.0
    %223 = vmatprep.subr.mxu0 0.0
    %224 = vmatpush1.msra.mxu0 0.0
    %225 = vmatprep.subr.mxu0 0.0
    %226 = vmatpush1.msra.mxu0 0.0
    %227 = vmatprep.subr.mxu0 0.0
    %228 = vmatpush1.msra.mxu0 0.0
    %229 = vmatprep.subr.mxu0 0.0
    %230 = vmatpush1.msra.mxu0 0.0
    %231 = vmatprep.subr.mxu0 0.0
    %232 = vmatpush1.msra.mxu0 0.0
    %233 = vmatprep.subr.mxu0 0.0
    %234 = vmatpush1.msra.mxu0 0.0
    %235 = vmatprep.subr.mxu0 0.0
    %236 = vmatpush1.msra.mxu0 0.0
    %237 = vmatprep.subr.mxu0 0.0
    %238 = vmatpush1.msra.mxu0 0.0
    %239 = vmatprep.subr.mxu0 0.0
    %240 = vmatpush1.msra.mxu0 0.0
    %241 = vmatprep.subr.mxu0 0.0
    %242 = vmatpush1.msra.mxu0 0.0
    %243 = vmatprep.subr.mxu0 0.0
    %244 = vmatpush1.msra.mxu0 0.0
    %245 = vmatprep.subr.mxu0 0.0
    %246 = vmatpush1.msra.mxu0 0.0
    %247 = vmatprep.subr.mxu0 0.0
    %248 = vmatpush1.msra.mxu0 0.0
    %249 = vmatprep.mubr.f32.mxu0 0.0
    %250 = vmatmul.mubr.f32.gmra.mrb[0].mxu0 %v183
    %v251 = vpop.f32.mrb[0].mxu0
    %v252 = vadd.f32 0.0, %v251
    %v253 = vpop.f32.mrb[0].mxu0
    %254 = vdwg.mxu0
    %256 = vset.pattern.permute.xlu0 0
    %257 = vperm.xlu0 %256, %v173
    %v258 = vpop.permute.xlu0 %257
    %v259 = vlaneseq
    %v260 = vshrl.u32 %v259, 7
    %v261 = vsub.s32 %v106, %v260
    %v262 = vrot.slane %v258, %v261
    %v263 = vsel %vm182, %v262, 0
    %265 = vmatprep.subr.mxu0 0.0
    %266 = vmatpush1.msra.mxu0 %v54
    %267 = vmatprep.subr.mxu0 0.0
    %268 = vmatpush1.msra.mxu0 0.0
    %269 = vmatprep.subr.mxu0 0.0
    %270 = vmatpush1.msra.mxu0 0.0
    %271 = vmatprep.subr.mxu0 0.0
    %272 = vmatpush1.msra.mxu0 0.0
    %273 = vmatprep.subr.mxu0 0.0
    %274 = vmatpush1.msra.mxu0 0.0
    %275 = vmatprep.subr.mxu0 0.0
    %276 = vmatpush1.msra.mxu0 0.0
    %277 = vmatprep.subr.mxu0 0.0
    %278 = vmatpush1.msra.mxu0 0.0
    %279 = vmatprep.subr.mxu0 0.0
    %280 = vmatpush1.msra.mxu0 0.0
    %281 = vmatprep.subr.mxu0 0.0
    %282 = vmatpush1.msra.mxu0 0.0
    %283 = vmatprep.subr.mxu0 0.0
    %284 = vmatpush1.msra.mxu0 0.0
    %285 = vmatprep.subr.mxu0 0.0
    %286 = vmatpush1.msra.mxu0 0.0
    %287 = vmatprep.subr.mxu0 0.0
    %288 = vmatpush1.msra.mxu0 0.0
    %289 = vmatprep.subr.mxu0 0.0
    %290 = vmatpush1.msra.mxu0 0.0
    %291 = vmatprep.subr.mxu0 0.0
    %292 = vmatpush1.msra.mxu0 0.0
    %293 = vmatprep.subr.mxu0 0.0
    %294 = vmatpush1.msra.mxu0 0.0
    %295 = vmatprep.subr.mxu0 0.0
    %296 = vmatpush1.msra.mxu0 0.0
    %297 = vmatprep.subr.mxu0 0.0
    %298 = vmatpush1.msra.mxu0 0.0
    %299 = vmatprep.subr.mxu0 0.0
    %300 = vmatpush1.msra.mxu0 0.0
    %301 = vmatprep.subr.mxu0 0.0
    %302 = vmatpush1.msra.mxu0 0.0
    %303 = vmatprep.subr.mxu0 0.0
    %304 = vmatpush1.msra.mxu0 0.0
    %305 = vmatprep.subr.mxu0 0.0
    %306 = vmatpush1.msra.mxu0 0.0
    %307 = vmatprep.subr.mxu0 0.0
    %308 = vmatpush1.msra.mxu0 0.0
    %309 = vmatprep.subr.mxu0 0.0
    %310 = vmatpush1.msra.mxu0 0.0
    %311 = vmatprep.subr.mxu0 0.0
    %312 = vmatpush1.msra.mxu0 0.0
    %313 = vmatprep.subr.mxu0 0.0
    %314 = vmatpush1.msra.mxu0 0.0
    %315 = vmatprep.subr.mxu0 0.0
    %316 = vmatpush1.msra.mxu0 0.0
    %317 = vmatprep.subr.mxu0 0.0
    %318 = vmatpush1.msra.mxu0 0.0
    %319 = vmatprep.subr.mxu0 0.0
    %320 = vmatpush1.msra.mxu0 0.0
    %321 = vmatprep.subr.mxu0 0.0
    %322 = vmatpush1.msra.mxu0 0.0
    %323 = vmatprep.subr.mxu0 0.0
    %324 = vmatpush1.msra.mxu0 0.0
    %325 = vmatprep.subr.mxu0 0.0
    %326 = vmatpush1.msra.mxu0 0.0
    %327 = vmatprep.subr.mxu0 0.0
    %328 = vmatpush1.msra.mxu0 0.0
    %329 = vmatprep.mubr.f32.mxu0 0.0
    %330 = vmatmul.mubr.f32.gmra.mrb[0].mxu0 %v263
    %v331 = vpop.f32.mrb[0].mxu0
    %v332 = vadd.f32 0.0, %v331
    %v333 = vpop.f32.mrb[0].mxu0
    %334 = vdwg.mxu0
    %v335 = vld [vmem:[#allocation6] sm:$0xff]
    %v336 = vld [vmem:[#allocation6 + $0x8] sm:$0xff]
    %v337 = vld [vmem:[#allocation6 + $0x10] sm:$0xff]
    %v338 = vld [vmem:[#allocation6 + $0x18] sm:$0xff]
    %v339 = vld [vmem:[%s5] sm:$0x1]
    %v341 = vlaneseq
    %v342 = vshrl.u32 %v341, 7
    %v343 = vsub.s32 0, %v342
    %v344 = vrot.slane %v339, %v343
    %v348 = vrot.slane %v332, 7
    %v349 = vsel %vm115, %v348, %v252
    %v350 = vsel %vm66, %v349, 0
    %352 = vmatprep.subr.mxu0 0.0
    %353 = vmatpush1.msra.mxu0 %v335
    %354 = vmatprep.subr.mxu0 0.0
    %355 = vmatpush1.msra.mxu0 %v336
    %356 = vmatprep.subr.mxu0 0.0
    %357 = vmatpush1.msra.mxu0 %v337
    %358 = vmatprep.subr.mxu0 0.0
    %359 = vmatpush1.msra.mxu0 %v338
    %360 = vmatprep.subr.mxu0 0.0
    %361 = vmatpush1.msra.mxu0 0.0
    %362 = vmatprep.subr.mxu0 0.0
    %363 = vmatpush1.msra.mxu0 0.0
    %364 = vmatprep.subr.mxu0 0.0
    %365 = vmatpush1.msra.mxu0 0.0
    %366 = vmatprep.subr.mxu0 0.0
    %367 = vmatpush1.msra.mxu0 0.0
    %368 = vmatprep.subr.mxu0 0.0
    %369 = vmatpush1.msra.mxu0 0.0
    %370 = vmatprep.subr.mxu0 0.0
    %371 = vmatpush1.msra.mxu0 0.0
    %372 = vmatprep.subr.mxu0 0.0
    %373 = vmatpush1.msra.mxu0 0.0
    %374 = vmatprep.subr.mxu0 0.0
    %375 = vmatpush1.msra.mxu0 0.0
    %376 = vmatprep.subr.mxu0 0.0
    %377 = vmatpush1.msra.mxu0 0.0
    %378 = vmatprep.subr.mxu0 0.0
    %379 = vmatpush1.msra.mxu0 0.0
    %380 = vmatprep.subr.mxu0 0.0
    %381 = vmatpush1.msra.mxu0 0.0
    %382 = vmatprep.subr.mxu0 0.0
    %383 = vmatpush1.msra.mxu0 0.0
    %384 = vmatprep.subr.mxu0 0.0
    %385 = vmatpush1.msra.mxu0 0.0
    %386 = vmatprep.subr.mxu0 0.0
    %387 = vmatpush1.msra.mxu0 0.0
    %388 = vmatprep.subr.mxu0 0.0
    %389 = vmatpush1.msra.mxu0 0.0
    %390 = vmatprep.subr.mxu0 0.0
    %391 = vmatpush1.msra.mxu0 0.0
    %392 = vmatprep.subr.mxu0 0.0
    %393 = vmatpush1.msra.mxu0 0.0
    %394 = vmatprep.subr.mxu0 0.0
    %395 = vmatpush1.msra.mxu0 0.0
    %396 = vmatprep.subr.mxu0 0.0
    %397 = vmatpush1.msra.mxu0 0.0
    %398 = vmatprep.subr.mxu0 0.0
    %399 = vmatpush1.msra.mxu0 0.0
    %400 = vmatprep.subr.mxu0 0.0
    %401 = vmatpush1.msra.mxu0 0.0
    %402 = vmatprep.subr.mxu0 0.0
    %403 = vmatpush1.msra.mxu0 0.0
    %404 = vmatprep.subr.mxu0 0.0
    %405 = vmatpush1.msra.mxu0 0.0
    %406 = vmatprep.subr.mxu0 0.0
    %407 = vmatpush1.msra.mxu0 0.0
    %408 = vmatprep.subr.mxu0 0.0
    %409 = vmatpush1.msra.mxu0 0.0
    %410 = vmatprep.subr.mxu0 0.0
    %411 = vmatpush1.msra.mxu0 0.0
    %412 = vmatprep.subr.mxu0 0.0
    %413 = vmatpush1.msra.mxu0 0.0
    %414 = vmatprep.subr.mxu0 0.0
    %415 = vmatpush1.msra.mxu0 0.0
    %416 = vmatprep.mubr.f32.mxu0 0.0
    %417 = vmatmul.mubr.f32.gmra.mrb[0].mxu0 %v350
    %v418 = vpop.f32.mrb[0].mxu0
    %v419 = vadd.f32 %v344, %v418
    %v420 = vpop.f32.mrb[0].mxu0
    %421 = vdwg.mxu0
    %422 = vst [vmem:[#allocation8] sm:$0x3] %v419
    // Predicated region
    $region34: #{tpu_custom_call.1} parent=1 // pred_check
      _
    $region35: #{tpu_custom_call.1} parent=1 // pred_check_branch
      %424 = sbr.rel (0) target = $region37
    $region36: #{tpu_custom_call.1} parent=1 // pred_region
      %s426 = ssub.s32 32, 32
      %427 = vsyncadd [#allocation5], %s426
      %s429 = sshll.u32 [#allocation8], 4
      %s430 = int_to_ptr.vmem [resolvable:$true] %s429
      %432 = dma.vmem_to_hbm [thread:$0]  %s430, 32, %s6, [#allocation5]
    $region37: #{tpu_custom_call.1} parent=1 // pred_fallthru
      _
    // Predicated region
    $region38: #{tpu_custom_call.1} parent=1 // pred_check
      _
    $region39: #{tpu_custom_call.1} parent=1 // pred_check_branch
      %434 = sbr.rel (0) target = $region41
    $region40: #{tpu_custom_call.1} parent=1 // pred_region
      %435 = dma.done [#allocation5], 32
    $region41: #{tpu_custom_call.1} parent=1 // pred_fallthru
      _
    %436 = vsyncpa [#allocation4], 1
    %437 = vsyncpa [#allocation7], 1
    %438 = vsyncpa [#allocation5], 1

</llo_original>
